<compile_context>
chip_gen: v7x
topology: tpu7x:2x2x1
jax: 0.10.0
libtpu: 0.0.40
codegen_flags: <defaults>
</compile_context>

<pallas_src>
import functools

import numpy as np
import jax
import jax.numpy as jnp
from jax import lax
from jax.experimental import pallas as pl
from jax.experimental.pallas import tpu as pltpu


def _mpjpe_kernel(pred_ref, gt_ref, out_ref, acc_ref, *, n_valid, n_inner, block_n):
    o = pl.program_id(0)          # outer ("parallel") chunk
    i = pl.program_id(1)          # inner ("arbitrary") step within the chunk

    @pl.when(i == 0)
    def _():
        acc_ref[...] = jnp.zeros_like(acc_ref)

    # (C, block_n) lane-dense tiles; upcast to f32 inside the kernel.
    diff = gt_ref[...].astype(jnp.float32) - pred_ref[...].astype(jnp.float32)
    sq_sum = jnp.sum(diff * diff, axis=0, keepdims=True)          # (1, block_n)

    # Mask lanes beyond the true joint count (partial last tile, and any
    # duplicated tile from an uneven outer split) before the sqrt.
    base = (o * n_inner + i) * block_n
    lane = lax.broadcasted_iota(jnp.int32, (1, block_n), 1)
    sq_sum = jnp.where(base + lane < n_valid, sq_sum, 0.0)

    acc_ref[...] += jnp.sqrt(sq_sum)                               # per-lane running sum of norms

    @pl.when(i == n_inner - 1)
    def _():
        total = jnp.sum(acc_ref[...])                              # one full reduce per chunk
        out_ref[...] = jnp.broadcast_to(total, out_ref.shape).astype(jnp.float32)


def mpjpe_loss(pred_pose, gt_pose, *, block_n=32768):
    """Pallas TPU implementation of LossFuncMPJPE.forward (forward only)."""
    assert pred_pose.shape == gt_pose.shape
    shape = pred_pose.shape
    C = int(shape[-1])
    N = int(np.prod(shape[:-1]))

    # Lane-dense layout: joints along the 128-lane axis -> (C, N).
    pred2 = jnp.transpose(pred_pose.reshape(N, C))
    gt2 = jnp.transpose(gt_pose.reshape(N, C))

    # Lane-axis tile: multiple of 128, or a single tile equal to the full axis.
    block_n = max(128, (int(block_n) // 128) * 128)
    if N <= block_n:
        blk = N
        total_blocks = 1
    else:
        blk = block_n
        total_blocks = -(-N // blk)

    # Outer "parallel" axis (size 2) so a 2-TC chip (v7x) can split the work;
    # harmless (sequential) on single-core chips.
    n_outer = 2 if total_blocks >= 2 else 1
    n_inner = -(-total_blocks // n_outer)

    def block_index(o, i):
        # Clamp so an uneven outer split never issues a fully out-of-bounds
        # DMA; the in-kernel mask (based on the *unclamped* index) zeroes any
        # duplicated contribution.
        return (0, jnp.minimum(o * n_inner + i, total_blocks - 1))

    kernel = functools.partial(
        _mpjpe_kernel, n_valid=N, n_inner=n_inner, block_n=blk)

    partials = pl.pallas_call(
        kernel,
        out_shape=jax.ShapeDtypeStruct((8 * n_outer, 128), jnp.float32),
        grid_spec=pltpu.PrefetchScalarGridSpec(
            num_scalar_prefetch=0,
            grid=(n_outer, n_inner),
            in_specs=[
                pl.BlockSpec((C, blk), block_index),
                pl.BlockSpec((C, blk), block_index),
            ],
            out_specs=pl.BlockSpec((8, 128), lambda o, i: (o, 0)),
            scratch_shapes=[pltpu.VMEM((1, blk), jnp.float32)],
        ),
        compiler_params=pltpu.CompilerParams(
            dimension_semantics=("parallel", "arbitrary"),
        ),
    )(pred2, gt2)

    # Each chunk broadcast its partial sum across its own (8, 128) block; pick
    # one element per chunk, combine, and divide by the true joint count.
    per_chunk = partials.reshape(n_outer, 8, 128)[:, 0, 0]
    return jnp.sum(per_chunk) / N


if __name__ == "__main__":
    key = jax.random.PRNGKey(0)
    k1, k2, k3, k4 = jax.random.split(key, 4)

    # --- Test 1: small f32 pose batch (batch=2, joints=16, coords=3) ---------
    pred_pose = jax.random.normal(k1, (2, 16, 3), dtype=jnp.float32)
    gt_pose = jax.random.normal(k2, (2, 16, 3), dtype=jnp.float32)

    loss = jax.block_until_ready(mpjpe_loss(pred_pose, gt_pose))
    ref = jnp.mean(jnp.linalg.norm(gt_pose - pred_pose, axis=-1))
    assert jnp.allclose(loss, ref, rtol=1e-4, atol=1e-5), (loss, ref)

    # --- Test 2: bf16 inputs + multi-block grid (exercises masking / 2-D grid)
    pred_b = jax.random.normal(k3, (4, 700, 3), dtype=jnp.bfloat16)
    gt_b = jax.random.normal(k4, (4, 700, 3), dtype=jnp.bfloat16)

    loss2 = jax.block_until_ready(mpjpe_loss(pred_b, gt_b, block_n=256))
    ref2 = jnp.mean(jnp.linalg.norm(
        gt_b.astype(jnp.float32) - pred_b.astype(jnp.float32), axis=-1))
    assert jnp.allclose(loss2, ref2, rtol=1e-4, atol=1e-5), (loss2, ref2)

    print("KERNEL_OK")
</pallas_src>

<mosaic_0001>
module attributes {stable_mosaic.version = 11 : i64} {
  func.func @_mpjpe_kernel(%arg0: i32, %arg1: i32, %arg2: memref<3x32xf32, #tpu.memory_space<vmem>>, %arg3: memref<3x32xf32, #tpu.memory_space<vmem>>, %arg4: memref<8x128xf32, #tpu.memory_space<vmem>>, %arg5: memref<1x32xf32, #tpu.memory_space<vmem>>) attributes {dimension_semantics = [#tpu.dimension_semantics<parallel>, #tpu.dimension_semantics<arbitrary>], iteration_bounds = array<i64: 1, 1>, scalar_prefetch = 0 : i64, scratch_operands = 1 : i64, tpu.core_type = #tpu.core_type<tc>, window_params = [{transform_indices = @transform_0, window_bounds = array<i64: 3, 32>}, {transform_indices = @transform_1, window_bounds = array<i64: 3, 32>}, {transform_indices = @transform_2, window_bounds = array<i64: 8, 128>}]} {
    %c0_i32 = arith.constant 0 : i32
    %0 = arith.cmpi eq, %arg1, %c0_i32 : i32
    %1 = arith.extui %0 : i1 to i32
    %c0_i32_0 = arith.constant 0 : i32
    %2 = arith.cmpi ne, %1, %c0_i32_0 : i32
    scf.if %2 {
      %cst_12 = arith.constant 0.000000e+00 : f32
      %26 = vector.broadcast %cst_12 : f32 to vector<1x32xf32>
      %c0_13 = arith.constant 0 : index
      %c0_14 = arith.constant 0 : index
      %27 = vector.load %arg5[%c0_13, %c0_14] : memref<1x32xf32, #tpu.memory_space<vmem>>, vector<1x32xf32>
      tpu.vector_store %arg5[%c0_13, %c0_14], %26 {strides = array<i32>} : memref<1x32xf32, #tpu.memory_space<vmem>>, vector<1x32xf32>,
    } else {
    }
    %c0 = arith.constant 0 : index
    %c0_1 = arith.constant 0 : index
    %3 = vector.load %arg3[%c0, %c0_1] : memref<3x32xf32, #tpu.memory_space<vmem>>, vector<3x32xf32>
    %c0_2 = arith.constant 0 : index
    %c0_3 = arith.constant 0 : index
    %4 = vector.load %arg2[%c0_2, %c0_3] : memref<3x32xf32, #tpu.memory_space<vmem>>, vector<3x32xf32>
    %5 = arith.subf %3, %4 : vector<3x32xf32>
    %6 = arith.mulf %5, %5 : vector<3x32xf32>
    %cst = arith.constant dense<0.000000e+00> : vector<32xf32>
    %7 = vector.multi_reduction <add>, %6, %cst [0] : vector<3x32xf32> to vector<32xf32>
    %8 = vector.shape_cast %7 : vector<32xf32> to vector<1x32xf32>
    %c1_i32 = arith.constant 1 : i32
    %9 = arith.muli %arg0, %c1_i32 : i32
    %10 = arith.addi %9, %arg1 : i32
    %c32_i32 = arith.constant 32 : i32
    %11 = arith.muli %10, %c32_i32 : i32
    %12 = tpu.iota {dimensions = array<i32: 1>} : vector<1x32xi32>
    %13 = vector.broadcast %11 : i32 to vector<1x32xi32>
    %14 = arith.addi %13, %12 : vector<1x32xi32>
    %c32_i32_4 = arith.constant 32 : i32
    %15 = vector.broadcast %c32_i32_4 : i32 to vector<1x32xi32>
    %16 = arith.cmpi slt, %14, %15 : vector<1x32xi32>
    %cst_5 = arith.constant 0.000000e+00 : f32
    %17 = vector.broadcast %cst_5 : f32 to vector<1x32xf32>
    %18 = arith.select %16, %8, %17 : vector<1x32xi1>, vector<1x32xf32>
    %c0_6 = arith.constant 0 : index
    %c0_7 = arith.constant 0 : index
    %19 = vector.load %arg5[%c0_6, %c0_7] : memref<1x32xf32, #tpu.memory_space<vmem>>, vector<1x32xf32>
    %20 = math.sqrt %18 : vector<1x32xf32>
    %21 = arith.addf %19, %20 : vector<1x32xf32>
    %c0_8 = arith.constant 0 : index
    %c0_9 = arith.constant 0 : index
    %22 = vector.load %arg5[%c0_8, %c0_9] : memref<1x32xf32, #tpu.memory_space<vmem>>, vector<1x32xf32>
    tpu.vector_store %arg5[%c0_8, %c0_9], %21 {strides = array<i32>} : memref<1x32xf32, #tpu.memory_space<vmem>>, vector<1x32xf32>,
    %c0_i32_10 = arith.constant 0 : i32
    %23 = arith.cmpi eq, %arg1, %c0_i32_10 : i32
    %24 = arith.extui %23 : i1 to i32
    %c0_i32_11 = arith.constant 0 : i32
    %25 = arith.cmpi ne, %24, %c0_i32_11 : i32
    scf.if %25 {
      %c0_12 = arith.constant 0 : index
      %c0_13 = arith.constant 0 : index
      %26 = vector.load %arg5[%c0_12, %c0_13] : memref<1x32xf32, #tpu.memory_space<vmem>>, vector<1x32xf32>
      %27 = vector.shape_cast %26 : vector<1x32xf32> to vector<1x1x32xf32>
      %cst_14 = arith.constant dense<0.000000e+00> : vector<1xf32>
      %28 = vector.multi_reduction <add>, %27, %cst_14 [1, 2] : vector<1x1x32xf32> to vector<1xf32>
      %29 = vector.shape_cast %28 : vector<1xf32> to vector<1x1x1xf32>
      %30 = vector.extract %29[0, 0, 0] : f32 from vector<1x1x1xf32>
      %31 = vector.broadcast %30 : f32 to vector<8x128xf32>
      %c0_15 = arith.constant 0 : index
      %c0_16 = arith.constant 0 : index
      %32 = vector.load %arg4[%c0_15, %c0_16] : memref<8x128xf32, #tpu.memory_space<vmem>>, vector<8x128xf32>
      tpu.vector_store %arg4[%c0_15, %c0_16], %31 {strides = array<i32>} : memref<8x128xf32, #tpu.memory_space<vmem>>, vector<8x128xf32>,
    } else {
    }
    return
  }
  func.func @transform_0(%arg0: i32, %arg1: i32) -> (i32, i32) {
    %c1_i32 = arith.constant 1 : i32
    %0 = arith.muli %arg0, %c1_i32 : i32
    %1 = arith.addi %0, %arg1 : i32
    %c0_i32 = arith.constant 0 : i32
    %2 = arith.minsi %1, %c0_i32 : i32
    %c0_i32_0 = arith.constant 0 : i32
    %c0_i32_1 = arith.constant 0 : i32
    return %c0_i32_0, %2 : i32, i32
  }
  func.func @transform_1(%arg0: i32, %arg1: i32) -> (i32, i32) {
    %c1_i32 = arith.constant 1 : i32
    %0 = arith.muli %arg0, %c1_i32 : i32
    %1 = arith.addi %0, %arg1 : i32
    %c0_i32 = arith.constant 0 : i32
    %2 = arith.minsi %1, %c0_i32 : i32
    %c0_i32_0 = arith.constant 0 : i32
    %c0_i32_1 = arith.constant 0 : i32
    return %c0_i32_0, %2 : i32, i32
  }
  func.func @transform_2(%arg0: i32, %arg1: i32) -> (i32, i32) {
    %c0_i32 = arith.constant 0 : i32
    %c0_i32_0 = arith.constant 0 : i32
    return %arg0, %c0_i32 : i32, i32
  }
}

</mosaic_0001>

<llo_original>
// kernel: tpu_custom_call.1
$region0: #{tpu_custom_call.1}
  #allocation0 [shape = 'u32[]', space=smem, size = 0x4, offset = 0x4, fixed_abs, tag = 'smem constant byte address 0x4 - core index']
  #allocation1 [shape = 'u32[144,128]{1,0:T(1,128)}', space=vmem, size = 0x12000, scoped, tag = 'internal scratch']
  #allocation2 [shape = 'f32[1,32]{1,0:T(1,128)}', space=vmem, size = 0x200, scoped, tag = 'scratch operand']
  %s0 = inlined_call_operand.hbm [shape: f32[3,32], index: 0, kind: input, shape index: {}]
  %s1 = inlined_call_operand.hbm [shape: f32[3,32], index: 1, kind: input, shape index: {}]
  %s2 = inlined_call_operand.hbm [shape: f32[8,128], index: 2, kind: output, shape index: {}]
  %s3 = sld [smem:[#allocation0]]
  $region34: #{tpu_custom_call.1} parent=0
    _
  %s5 = ssub.s32 1, %s3
  %s6 = scalar_select 0, %s5, %s3
  $region1: #{tpu_custom_call.1} parent=0
    #allocation3 [shape = 'u8[2048]{0}', space=vmem, size = 0x800, scoped, tag = 'input window, operand 0, single buffered']
    #allocation4 [shape = 's32[1]{0}', space=sflag, size = 0x4, scoped, tag = 'scoped memory for tpu_custom_call.1']
    #allocation5 [shape = 's32[1]{0}', space=sflag, size = 0x4, scoped, tag = 'scoped memory for tpu_custom_call.1']
    #allocation6 [shape = 'u8[2048]{0}', space=vmem, size = 0x800, scoped, tag = 'input window, operand 1, single buffered']
    #allocation7 [shape = 's32[1]{0}', space=sflag, size = 0x4, scoped, tag = 'scoped memory for tpu_custom_call.1']
    #allocation8 [shape = 'u8[4096]{0}', space=vmem, size = 0x1000, scoped, tag = 'output window, operand 0, single buffered']
    %7 = vsyncpa [#allocation4], 0
    %8 = vsyncpa [#allocation7], 0
    %9 = vsyncpa [#allocation5], 0
    // Predicated region
    $region2: #{tpu_custom_call.1} parent=1 // pred_check
      _
    $region3: #{tpu_custom_call.1} parent=1 // pred_check_branch
      %11 = sbr.rel (0) target = $region5
    $region4: #{tpu_custom_call.1} parent=1 // pred_region
      %s12 = sadd.s32 0, 0
      %p13 = scmp.lt.s32.totalorder %s12, 0
      %s14 = scalar_select %p13, %s12, 0
      %s16 = ssub.s32 64, 64
      %17 = vsyncadd [#allocation4], %s16
      %s18 = smul.addr %s14, 64
      %s19 = scalar_lea.hbm %s0, %s18
      %s21 = sshll.u32 [#allocation3], 4
      %s22 = int_to_ptr.vmem [resolvable:$true] %s21
      %24 = dma.hbm_to_vmem [thread:$0]  %s19, 64, %s22, [#allocation4]
    $region5: #{tpu_custom_call.1} parent=1 // pred_fallthru
      _
    // Predicated region
    $region6: #{tpu_custom_call.1} parent=1 // pred_check
      _
    $region7: #{tpu_custom_call.1} parent=1 // pred_check_branch
      %26 = sbr.rel (0) target = $region9
    $region8: #{tpu_custom_call.1} parent=1 // pred_region
      %s27 = sadd.s32 0, 0
      %p28 = scmp.lt.s32.totalorder %s27, 0
      %s29 = scalar_select %p28, %s27, 0
      %s31 = ssub.s32 64, 64
      %32 = vsyncadd [#allocation7], %s31
      %s33 = smul.addr %s29, 64
      %s34 = scalar_lea.hbm %s1, %s33
      %s36 = sshll.u32 [#allocation6], 4
      %s37 = int_to_ptr.vmem [resolvable:$true] %s36
      %39 = dma.hbm_to_vmem [thread:$0]  %s34, 64, %s37, [#allocation7]
    $region9: #{tpu_custom_call.1} parent=1 // pred_fallthru
      _
    // Predicated region
    $region10: #{tpu_custom_call.1} parent=1 // pred_check
      _
    $region11: #{tpu_custom_call.1} parent=1 // pred_check_branch
      %41 = sbr.rel (0) target = $region13
    $region12: #{tpu_custom_call.1} parent=1 // pred_region
      %42 = dma.done [#allocation4], 64
    $region13: #{tpu_custom_call.1} parent=1 // pred_fallthru
      _
    // Predicated region
    $region14: #{tpu_custom_call.1} parent=1 // pred_check
      _
    $region15: #{tpu_custom_call.1} parent=1 // pred_check_branch
      %44 = sbr.rel (0) target = $region17
    $region16: #{tpu_custom_call.1} parent=1 // pred_region
      %45 = dma.done [#allocation7], 64
    $region17: #{tpu_custom_call.1} parent=1 // pred_fallthru
      _
    %s46 = sadd.s32 0, 0
    %p47 = scmp.lt.s32.totalorder %s46, 0
    %s48 = scalar_select %p47, %s46, 0
    %s49 = sadd.s32 0, 0
    %p50 = scmp.lt.s32.totalorder %s49, 0
    %s51 = scalar_select %p50, %s49, 0
    %p52 = scmp.eq.s32.totalorder 0, 0
    // Predicated region
    $region18: #{tpu_custom_call.1} parent=1 // pred_check
      %p53 = pneg %p52
    $region19: #{tpu_custom_call.1} parent=1 // pred_check_branch
      %55 = sbr.rel (%p53) target = $region21
    $region20: #{tpu_custom_call.1} parent=1 // pred_region
      %vm56 = vcmask 253952
      %57 = vst.msk [vmem:[#allocation2] sm:$0x1] %vm56, 0.0
    $region21: #{tpu_custom_call.1} parent=1 // pred_fallthru
      _
    %v58 = vld [vmem:[#allocation6] sm:$0x7]
    %v59 = vld [vmem:[#allocation3] sm:$0x7]
    %v60 = vsub.f32 %v58, %v59
    %v61 = vmul.f32 %v60, %v60
    %vm62 = vcmask 256000
    %v63 = vsel %vm62, %v61, 0.0
    %v64 = vrot.slane %v63, 4
    %v65 = vadd.f32 %v63, %v64
    %v66 = vrot.slane %v65, 2
    %v67 = vadd.f32 %v65, %v66
    %v68 = vrot.slane %v67, 1
    %v69 = vadd.f32 %v67, %v68
    %s70 = sadd.s32 0, 0
    %s71 = smul.u32 %s70, 32
    %v72 = vlaneseq
    %v73 = vand.u32 %v72, 127
    %v74 = vstv %s71
    %v75 = vadd.s32 %v74, %v73
    %vm76 = vcmp.lt.s32.totalorder %v75, 32
    %v77 = vsel %vm76, %v69, 0.0
    %v78 = vld [vmem:[#allocation2] sm:$0x1]
    %v79 = vrsqrt.pop %v77
    %v80 = vmul.f32 %v77, %v79
    %vm81 = vcmp.eq.f32.partialorder %v77, inf
    %v82 = vsel %vm81, %v77, %v80
    %vm83 = vcmp.eq.f32.partialorder %v77, 0.0
    %v84 = vand.u32 %v77, 2147483648
    %v85 = vsel %vm83, %v84, %v82
    %v86 = vadd.f32 %v78, %v85
    %vm87 = vcmask 253952
    %88 = vst.msk [vmem:[#allocation2] sm:$0x1] %vm87, %v86
    // Predicated region
    $region22: #{tpu_custom_call.1} parent=1 // pred_check
      %p89 = pneg %p52
    $region23: #{tpu_custom_call.1} parent=1 // pred_check_branch
      %91 = sbr.rel (%p89) target = $region25
    $region24: #{tpu_custom_call.1} parent=1 // pred_region
      %v92 = vld [vmem:[#allocation2] sm:$0x1]
      %v93 = vsel %vm87, %v92, 0.0
      %94 = vadd.xlane.f32.xlu0 %v93
      %v95 = vpop.xlane.xlu0 %94
      %v96 = vrot.slane %v95, 4
      %v97 = vadd.f32 %v95, %v96
      %v98 = vrot.slane %v97, 2
      %v99 = vadd.f32 %v97, %v98
      %v100 = vrot.slane %v99, 1
      %v101 = vadd.f32 %v99, %v100
      %s102 = vtos %v101
      %v103 = vstv %s102
      %104 = vst [vmem:[#allocation8] sm:$0xff] %v103
    $region25: #{tpu_custom_call.1} parent=1 // pred_fallthru
      _
    // Predicated region
    $region26: #{tpu_custom_call.1} parent=1 // pred_check
      _
    $region27: #{tpu_custom_call.1} parent=1 // pred_check_branch
      %106 = sbr.rel (0) target = $region29
    $region28: #{tpu_custom_call.1} parent=1 // pred_region
      %s108 = ssub.s32 128, 128
      %109 = vsyncadd [#allocation5], %s108
      %s111 = sshll.u32 [#allocation8], 4
      %s112 = int_to_ptr.vmem [resolvable:$true] %s111
      %114 = dma.vmem_to_hbm [thread:$0]  %s112, 128, %s2, [#allocation5]
    $region29: #{tpu_custom_call.1} parent=1 // pred_fallthru
      _
    // Predicated region
    $region30: #{tpu_custom_call.1} parent=1 // pred_check
      _
    $region31: #{tpu_custom_call.1} parent=1 // pred_check_branch
      %116 = sbr.rel (0) target = $region33
    $region32: #{tpu_custom_call.1} parent=1 // pred_region
      %117 = dma.done [#allocation5], 128
    $region33: #{tpu_custom_call.1} parent=1 // pred_fallthru
      _
    %118 = vsyncpa [#allocation4], 1
    %119 = vsyncpa [#allocation7], 1
    %120 = vsyncpa [#allocation5], 1

</llo_original>
